<compile_context>
chip_gen: v7x
topology: tpu7x:2x2x1
jax: 0.10.0
libtpu: 0.0.40
codegen_flags: <defaults>
</compile_context>

<pallas_src>
import math

import jax
import jax.numpy as jnp
from jax.experimental import pallas as pl
from jax.experimental.pallas import tpu as pltpu

_TARGET_BLOCK_BYTES = 2 * 1024 * 1024  # ~2 MiB blocks: >=85% of HBM roofline,
                                       # 8 MiB double-buffered in+out footprint.


def _round_up(n, m):
    return ((n + m - 1) // m) * m


def gauss_memb_kernel(params_ref, x_ref, o_ref):
    # params_ref: SMEM (2,) f32 holding [mu, scale] with scale = -1/(2*sigma^2)
    mu = params_ref[0]
    scale = params_ref[1]
    x = x_ref[...].astype(jnp.float32)          # f32 compute even for bf16 input
    d = x - mu
    o_ref[...] = jnp.exp(d * d * scale).astype(o_ref.dtype)


def _as_2d(x):
    """Collapse x to a lane-dense (rows, lanes) view with a free reshape (no pad)."""
    if x.ndim >= 2:
        lanes = x.shape[-1]
        rows = math.prod(x.shape[:-1])
        return x.reshape(rows, lanes), rows, lanes
    total = x.size
    # 1-D / scalar input: largest 128-multiple width that divides exactly.
    for lanes in (1024, 512, 256, 128):
        if total >= lanes and total % lanes == 0:
            return x.reshape(total // lanes, lanes), total // lanes, lanes
    # Truly ragged 1-D size: one full-extent row (block last dim == full array
    # dim is legal; stores are masked but no pad/slice HBM copies are made).
    return x.reshape(1, total), 1, total


@jax.jit
def gauss_memb(x, mu, sigma):
    """Elementwise exp(-(x - mu)^2 / (2 * sigma^2)); dtype-preserving, any rank."""
    orig_shape = x.shape
    x2d, rows, lanes = _as_2d(x)

    # Hoist all scalar math on the host/XLA side; one SMEM operand.
    mu_f = jnp.asarray(mu, dtype=jnp.float32)
    sigma_f = jnp.asarray(sigma, dtype=jnp.float32)
    params = jnp.stack([mu_f, -1.0 / (2.0 * sigma_f * sigma_f)])

    itemsize = jnp.dtype(x.dtype).itemsize
    # Largest 8-aligned row block that keeps one block near the 2 MiB target.
    max_rows = max(8, (_TARGET_BLOCK_BYTES // max(1, lanes * itemsize)) // 8 * 8)
    if rows > 8 and rows <= 2 * max_rows:
        # Split into >=2 roughly equal blocks so both v7x TensorCores stream;
        # on v5e/v6e this only costs one extra ~0.35 us grid step.
        block_rows = min(rows, _round_up(pl.cdiv(rows, 2), 8))
    else:
        block_rows = min(rows, max_rows)
    grid = (pl.cdiv(rows, block_rows),)

    n_elems = rows * lanes
    out2d = pl.pallas_call(
        gauss_memb_kernel,
        out_shape=jax.ShapeDtypeStruct((rows, lanes), x.dtype),
        grid=grid,
        in_specs=[
            pl.BlockSpec(memory_space=pltpu.MemorySpace.SMEM),     # [mu, scale]
            pl.BlockSpec((block_rows, lanes), lambda i: (i, 0)),   # x block
        ],
        out_specs=pl.BlockSpec((block_rows, lanes), lambda i: (i, 0)),
        compiler_params=pltpu.CompilerParams(
            dimension_semantics=("parallel",)),
        cost_estimate=pl.CostEstimate(
            flops=3 * n_elems,
            transcendentals=n_elems,
            bytes_accessed=2 * n_elems * itemsize),
    )(params, x2d)

    return out2d.reshape(orig_shape)


if __name__ == "__main__":
    key = jax.random.PRNGKey(0)
    # Small input consistent with ANFIS membership evaluation: (batch, features)
    x = jax.random.normal(key, (16, 256), dtype=jnp.float32)

    # Deterministic parameter initialization (module __init__ takes scalars mu, sigma)
    mu = 0.5
    sigma = 1.25
    # TODO(synk): the nan-scrubbing gradient hooks (mu_log_hook/sigma_log_hook) are
    # backward-pass machinery and have no forward-pass Pallas equivalent.

    out = gauss_memb(x, mu, sigma)
    out = jax.block_until_ready(out)

    # Pure-JAX reference for correctness check
    ref = jnp.exp(-jnp.square(x - mu) / (2.0 * sigma ** 2))
    assert out.shape == x.shape and out.dtype == x.dtype
    assert jnp.allclose(out, ref, atol=1e-6, rtol=1e-6)

    print("KERNEL_OK")
</pallas_src>

<mosaic_0001>
module attributes {stable_mosaic.version = 11 : i64} {
  func.func @gauss_memb_kernel(%arg0: i32, %arg1: memref<2xf32, #tpu.memory_space<smem>>, %arg2: memref<8x256xf32, #tpu.memory_space<vmem>>, %arg3: memref<8x256xf32, #tpu.memory_space<vmem>>) attributes {dimension_semantics = [#tpu.dimension_semantics<parallel>], iteration_bounds = array<i64: 2>, scalar_prefetch = 0 : i64, scratch_operands = 0 : i64, tpu.core_type = #tpu.core_type<tc>, window_params = [{transform_indices = @transform_0, window_bounds = array<i64: 2>}, {transform_indices = @transform_1, window_bounds = array<i64: 8, 256>}, {transform_indices = @transform_2, window_bounds = array<i64: 8, 256>}]} {
    %c0 = arith.constant 0 : index
    %0 = memref.load %arg1[%c0] : memref<2xf32, #tpu.memory_space<smem>>
    %c1 = arith.constant 1 : index
    %1 = memref.load %arg1[%c1] : memref<2xf32, #tpu.memory_space<smem>>
    %c0_0 = arith.constant 0 : index
    %c0_1 = arith.constant 0 : index
    %2 = vector.load %arg2[%c0_0, %c0_1] : memref<8x256xf32, #tpu.memory_space<vmem>>, vector<8x256xf32>
    %3 = vector.broadcast %0 : f32 to vector<8x256xf32>
    %4 = arith.subf %2, %3 : vector<8x256xf32>
    %5 = arith.mulf %4, %4 : vector<8x256xf32>
    %6 = vector.broadcast %1 : f32 to vector<8x256xf32>
    %7 = arith.mulf %5, %6 : vector<8x256xf32>
    %8 = math.exp %7 : vector<8x256xf32>
    %c0_2 = arith.constant 0 : index
    %c0_3 = arith.constant 0 : index
    %9 = vector.load %arg3[%c0_2, %c0_3] : memref<8x256xf32, #tpu.memory_space<vmem>>, vector<8x256xf32>
    tpu.vector_store %arg3[%c0_2, %c0_3], %8 {strides = array<i32>} : memref<8x256xf32, #tpu.memory_space<vmem>>, vector<8x256xf32>,
    return
  }
  func.func @transform_0(%arg0: i32) -> i32 {
    %c0_i32 = arith.constant 0 : i32
    %c0_i32_0 = arith.constant 0 : i32
    return %c0_i32 : i32
  }
  func.func @transform_1(%arg0: i32) -> (i32, i32) {
    %c0_i32 = arith.constant 0 : i32
    %c0_i32_0 = arith.constant 0 : i32
    return %arg0, %c0_i32 : i32, i32
  }
  func.func @transform_2(%arg0: i32) -> (i32, i32) {
    %c0_i32 = arith.constant 0 : i32
    %c0_i32_0 = arith.constant 0 : i32
    return %arg0, %c0_i32 : i32, i32
  }
}

</mosaic_0001>

<llo_original>
// kernel: gauss_memb.1
$region0: #{gauss_memb.1}
  #allocation0 [shape = 'u32[]', space=smem, size = 0x4, offset = 0x4, fixed_abs, tag = 'smem constant byte address 0x4 - core index']
  #allocation1 [shape = 'u32[144,128]{1,0:T(1,128)}', space=vmem, size = 0x12000, scoped, tag = 'internal scratch']
  %s0 = inlined_call_operand.vmem [shape: f32[2], index: 0, kind: input, shape index: {}]
  %s1 = inlined_call_operand.hbm [shape: f32[16,256], index: 1, kind: input, shape index: {}]
  %s2 = inlined_call_operand.hbm [shape: f32[16,256], index: 2, kind: output, shape index: {}]
  %s3 = sld [smem:[#allocation0]]
  $region49: #{gauss_memb.1} parent=0
    _
  %s5 = ssub.s32 1, %s3
  %s6 = scalar_select 0, %s5, %s3
  $region1: #{gauss_memb.1} parent=0
    #allocation2 [shape = 'u8[512]{0}', space=smem, size = 0x200, scoped, tag = 'input window, operand 0, single buffered']
    #allocation3 [shape = 's32[2]{0}', space=sflag, size = 0x8, scoped, tag = 'scoped memory for gauss_memb.1']
    #allocation4 [shape = 's32[2]{0}', space=sflag, size = 0x8, scoped, tag = 'scoped memory for gauss_memb.1']
    #allocation5 [shape = 's32[2]{0}', space=sflag, size = 0x8, scoped, tag = 'scoped memory for gauss_memb.1']
    #allocation6 [shape = 'u8[16384]{0}', space=vmem, size = 0x4000, scoped, tag = 'input window, operand 1']
    #allocation7 [shape = 'u8[16384]{0}', space=vmem, size = 0x4000, scoped, tag = 'output window, operand 0']
    %7 = vsyncpa [#allocation5], 0
    %8 = vsyncpa [#allocation3], 0
    %s9 = scalar_lea.sflag [#allocation3], 1
    %10 = vsyncpa %s9, 0
    %11 = vsyncpa [#allocation4], 0
    %s12 = scalar_lea.sflag [#allocation4], 1
    %13 = vsyncpa %s12, 0
    loop: start=0, step=1, limit=4
    $region2: #{gauss_memb.1} parent=1 // loop_pre_header
      _
    $region3: #{gauss_memb.1} parent=1 // loop_header
      %s15 = sphi 0, %s19
      %p16 = scmp.ge.s32.totalorder %s15, 4
      %s23 = sphi 0, %s23
      %s25 = sphi 0, %s23
      %s26 = sphi 0, %s25
      %s40 = sphi 0, %s26
      %s46 = sphi 0, %s48
      %s49 = sphi 0, %s46
      %s50 = sphi 0, %s49
      %s66 = sphi 0, %s50
      %s72 = sphi 0, %s74
      %s75 = sphi 0, %s72
      %s76 = sphi 0, %s75
      %s92 = sphi 0, %s76
    $region4: #{gauss_memb.1} parent=1 // loop_header_branch
      %18 = sbr.rel (%p16) target = $region8
    $region5: #{gauss_memb.1} parent=1 // loop_body
      %s20 = ssub.s32 %s15, 1
      %s21 = ssub.s32 %s15, 2
      %s22 = sadd.s32 %s15, 1
      %s24 = sadd.s32 %s23, 1
      %p27 = scmp.eq.s32.totalorder %s15, 1
      %p28 = scmp.ne.s32.totalorder %s23, %s25
      %p29 = scmp.eq.s32.totalorder %s15, 0
      %p30 = por %p28, %p29
      %p31 = scmp.ne.s32.totalorder %s23, %s25
      %p32 = scmp.eq.s32.totalorder %s20, 1
      %p33 = por %p31, %p32
      %p34 = scmp.ne.s32.totalorder %s25, %s26
      %p35 = scmp.eq.s32.totalorder %s20, 0
      %p36 = por %p34, %p35
      %p37 = scmp.ne.s32.totalorder %s25, %s26
      %p38 = scmp.eq.s32.totalorder %s21, 1
      %p39 = por %p37, %p38
      %p41 = scmp.ne.s32.totalorder %s26, %s40
      %p42 = scmp.eq.s32.totalorder %s21, 0
      %p43 = por %p41, %p42
      %s44 = ssub.s32 %s15, %s22
      %p45 = scmp.eq.s32.totalorder %s44, 0
      %s47 = sadd.s32 %s46, 1
      %s48 = scalar_select %p45, %s46, %s47
      %p51 = pneg %p45
      %p52 = scmp.eq.s32.totalorder %s15, 1
      %p53 = por %p51, %p52
      %p54 = scmp.ne.s32.totalorder %s46, %s49
      %p55 = scmp.eq.s32.totalorder %s15, 0
      %p56 = por %p54, %p55
      %p57 = scmp.ne.s32.totalorder %s46, %s49
      %p58 = scmp.eq.s32.totalorder %s20, 1
      %p59 = por %p57, %p58
      %p60 = scmp.ne.s32.totalorder %s49, %s50
      %p61 = scmp.eq.s32.totalorder %s20, 0
      %p62 = por %p60, %p61
      %p63 = scmp.ne.s32.totalorder %s49, %s50
      %p64 = scmp.eq.s32.totalorder %s21, 1
      %p65 = por %p63, %p64
      %p67 = scmp.ne.s32.totalorder %s50, %s66
      %p68 = scmp.eq.s32.totalorder %s21, 0
      %p69 = por %p67, %p68
      %s70 = ssub.s32 %s15, %s22
      %p71 = scmp.eq.s32.totalorder %s70, 0
      %s73 = sadd.s32 %s72, 1
      %s74 = scalar_select %p71, %s72, %s73
      %p77 = pneg %p71
      %p78 = scmp.eq.s32.totalorder %s15, 1
      %p79 = por %p77, %p78
      %p80 = scmp.ne.s32.totalorder %s72, %s75
      %p81 = scmp.eq.s32.totalorder %s15, 0
      %p82 = por %p80, %p81
      %p83 = scmp.ne.s32.totalorder %s72, %s75
      %p84 = scmp.eq.s32.totalorder %s20, 1
      %p85 = por %p83, %p84
      %p86 = scmp.ne.s32.totalorder %s75, %s76
      %p87 = scmp.eq.s32.totalorder %s20, 0
      %p88 = por %p86, %p87
      %p89 = scmp.ne.s32.totalorder %s75, %s76
      %p90 = scmp.eq.s32.totalorder %s21, 1
      %p91 = por %p89, %p90
      %p93 = scmp.ne.s32.totalorder %s76, %s92
      %p94 = scmp.eq.s32.totalorder %s21, 0
      %p95 = por %p93, %p94
      %p96 = scmp.le.s32.totalorder 1, %s15
      %p97 = scmp.lt.s32.totalorder %s15, 3
      %p98 = pnand %p96, %p97
      %p99 = pneg %p98
      // Predicated region
      $region9: #{gauss_memb.1} parent=5 // pred_check
        _
      $region10: #{gauss_memb.1} parent=5 // pred_check_branch
        %101 = sbr.rel (%p98) target = $region12
      $region11: #{gauss_memb.1} parent=5 // pred_region
        %s102 = ssub.s32 %s15, 1
        // Predicated region
        $region13: #{gauss_memb.1} parent=11 // pred_check
          %p103 = pneg %p36
        $region14: #{gauss_memb.1} parent=11 // pred_check_branch
          %105 = sbr.rel (%p103) target = $region16
        $region15: #{gauss_memb.1} parent=11 // pred_region
          %s107 = ssub.s32 16, 16
          %108 = vsyncadd [#allocation5], %s107
          %s110 = sshll.u32 %s0, 4
          %s111 = int_to_ptr.vmem [resolvable:$true] %s110
          %113 = dma.vmem_to_smem %s111, 16, [#allocation2], [#allocation5]
        $region16: #{gauss_memb.1} parent=11 // pred_fallthru
          _
      $region12: #{gauss_memb.1} parent=5 // pred_fallthru
        _
      %p114 = scmp.lt.s32.totalorder %s15, 2
      // Predicated region
      $region17: #{gauss_memb.1} parent=5 // pred_check
        %p115 = pneg %p114
      $region18: #{gauss_memb.1} parent=5 // pred_check_branch
        %117 = sbr.rel (%p115) target = $region20
      $region19: #{gauss_memb.1} parent=5 // pred_region
        // Predicated region
        $region21: #{gauss_memb.1} parent=19 // pred_check
          %p118 = pneg %p56
        $region22: #{gauss_memb.1} parent=19 // pred_check_branch
          %120 = sbr.rel (%p118) target = $region24
        $region23: #{gauss_memb.1} parent=19 // pred_region
          %s121 = sand.u32 %s46, 1
          %s122 = scalar_lea.sflag [#allocation3], %s121
          %s123 = sand.u32 %s46, 1
          %s124 = smul.addr %s123, 16
          %s125 = scalar_lea.vmem [#allocation6], %s124
          %s127 = ssub.s32 256, 256
          %128 = vsyncadd %s122, %s127
          %s129 = smul.addr %s15, 2
          %s130 = smul.addr %s129, 128
          %s131 = scalar_lea.hbm %s1, %s130
          %s133 = sshll.u32 %s125, 4
          %s134 = int_to_ptr.vmem [resolvable:$true] %s133
          %136 = dma.hbm_to_vmem [thread:$0]  %s131, 256, %s134, %s122
        $region24: #{gauss_memb.1} parent=19 // pred_fallthru
          _
      $region20: #{gauss_memb.1} parent=5 // pred_fallthru
        _
      %p137 = scmp.le.s32.totalorder 1, %s15
      %p138 = scmp.lt.s32.totalorder %s15, 3
      %p139 = pnand %p137, %p138
      %p140 = pneg %p139
      // Predicated region
      $region25: #{gauss_memb.1} parent=5 // pred_check
        _
      $region26: #{gauss_memb.1} parent=5 // pred_check_branch
        %142 = sbr.rel (%p139) target = $region28
      $region27: #{gauss_memb.1} parent=5 // pred_region
        %s143 = ssub.s32 %s15, 1
        // Predicated region
        $region29: #{gauss_memb.1} parent=27 // pred_check
          %p144 = pneg %p36
        $region30: #{gauss_memb.1} parent=27 // pred_check_branch
          %146 = sbr.rel (%p144) target = $region32
        $region31: #{gauss_memb.1} parent=27 // pred_region
          %147 = dma.done [#allocation5], 16
        $region32: #{gauss_memb.1} parent=27 // pred_fallthru
          _
        %s148 = sand.u32 %s49, 1
        %s149 = scalar_lea.sflag [#allocation3], %s148
        %s150 = sand.u32 %s49, 1
        %s151 = smul.addr %s150, 16
        %s152 = scalar_lea.vmem [#allocation6], %s151
        // Predicated region
        $region33: #{gauss_memb.1} parent=27 // pred_check
          %p153 = pneg %p62
        $region34: #{gauss_memb.1} parent=27 // pred_check_branch
          %155 = sbr.rel (%p153) target = $region36
        $region35: #{gauss_memb.1} parent=27 // pred_region
          %156 = dma.done %s149, 256
        $region36: #{gauss_memb.1} parent=27 // pred_fallthru
          _
        %157 = sfence
        %p158 = pneg %p36
        %p159 = pneg %p33
        %s160 = sand.u32 %s49, 1
        %s161 = scalar_lea.sflag [#allocation3], %s160
        %s162 = sand.u32 %s49, 1
        %s163 = smul.addr %s162, 16
        %s164 = scalar_lea.vmem [#allocation6], %s163
        %p165 = pneg %p62
        %p166 = pneg %p59
        %p167 = pneg %p88
        %p168 = pneg %p85
        %s169 = sand.u32 %s75, 1
        %s170 = scalar_lea.sflag [#allocation4], %s169
        %s171 = sand.u32 %s75, 1
        %s172 = smul.addr %s171, 16
        %s173 = scalar_lea.vmem [#allocation7], %s172
        %s174 = sld [smem:[#allocation2]]
        %s175 = sld [smem:[#allocation2 + $0x1]]
        %v176 = vld [vmem:[%s152] sm:$0xff]
        %v177 = vld [vmem:[%s152 + $0x8] sm:$0xff]
        %v178 = vstv %s174
        %v179 = vsub.f32 %v176, %v178
        %v180 = vsub.f32 %v177, %v178
        %v181 = vmul.f32 %v179, %v179
        %v182 = vmul.f32 %v180, %v180
        %v183 = vstv %s175
        %v184 = vmul.f32 %v181, %v183
        %v185 = vmul.f32 %v182, %v183
        %v186 = vmul.f32 %v184, 1.442695
        %v187 = vpow.pop %v186
        %v188 = vmul.f32 %v185, 1.442695
        %v189 = vpow.pop %v188
        %190 = vst [vmem:[%s173] sm:$0xff] %v187
        %191 = vst [vmem:[%s173 + $0x8] sm:$0xff] %v189
        %s192 = sand.u32 %s75, 1
        %s193 = scalar_lea.sflag [#allocation4], %s192
        %s194 = sand.u32 %s75, 1
        %s195 = smul.addr %s194, 16
        %s196 = scalar_lea.vmem [#allocation7], %s195
        // Predicated region
        $region37: #{gauss_memb.1} parent=27 // pred_check
          %p197 = pneg %p85
        $region38: #{gauss_memb.1} parent=27 // pred_check_branch
          %199 = sbr.rel (%p197) target = $region40
        $region39: #{gauss_memb.1} parent=27 // pred_region
          %s201 = ssub.s32 256, 256
          %202 = vsyncadd %s193, %s201
          %s203 = smul.addr %s20, 2
          %s204 = smul.addr %s203, 128
          %s205 = scalar_lea.hbm %s2, %s204
          %s207 = sshll.u32 %s196, 4
          %s208 = int_to_ptr.vmem [resolvable:$true] %s207
          %210 = dma.vmem_to_hbm [thread:$0]  %s208, 256, %s205, %s193
        $region40: #{gauss_memb.1} parent=27 // pred_fallthru
          _
      $region28: #{gauss_memb.1} parent=5 // pred_fallthru
        _
      %p211 = scmp.le.s32.totalorder 2, %s15
      // Predicated region
      $region41: #{gauss_memb.1} parent=5 // pred_check
        %p212 = pneg %p211
      $region42: #{gauss_memb.1} parent=5 // pred_check_branch
        %214 = sbr.rel (%p212) target = $region44
      $region43: #{gauss_memb.1} parent=5 // pred_region
        %s215 = ssub.s32 %s15, 2
        // Predicated region
        $region45: #{gauss_memb.1} parent=43 // pred_check
          %p216 = pneg %p91
        $region46: #{gauss_memb.1} parent=43 // pred_check_branch
          %218 = sbr.rel (%p216) target = $region48
        $region47: #{gauss_memb.1} parent=43 // pred_region
          %s219 = sand.u32 %s76, 1
          %s220 = scalar_lea.sflag [#allocation4], %s219
          %s221 = sand.u32 %s76, 1
          %s222 = smul.addr %s221, 16
          %s223 = scalar_lea.vmem [#allocation7], %s222
          %224 = dma.done %s220, 256
        $region48: #{gauss_memb.1} parent=43 // pred_fallthru
          _
      $region44: #{gauss_memb.1} parent=5 // pred_fallthru
        _
    $region6: #{gauss_memb.1} parent=1 // loop_footer
      %s19 = sadd.s32 1, %s15
    $region7: #{gauss_memb.1} parent=1 // loop_footer_branch
      %14 = sbr.rel target = $region3
    $region8: #{gauss_memb.1} parent=1 // loop_exit
      _
    %225 = vsyncpa [#allocation3], 1
    %s226 = scalar_lea.sflag [#allocation3], 1
    %227 = vsyncpa %s226, 1
    %228 = vsyncpa [#allocation4], 1
    %s229 = scalar_lea.sflag [#allocation4], 1
    %230 = vsyncpa %s229, 1
    %231 = vsyncpa [#allocation5], 1
    %s232 = scalar_lea.sflag [#allocation5], 1
    %233 = vsyncpa %s232, 1

</llo_original>
